<compile_context>
chip_gen: v6e
topology: v6e:2x2x1
jax: 0.10.0
libtpu: 0.0.40
codegen_flags: <defaults>
</compile_context>

<pallas_src>
import jax
import jax.numpy as jnp
from jax.experimental import pallas as pl
from jax.experimental.pallas import tpu as pltpu


def _attention_kernel(q_ref, k_ref, v_ref, w_ref, b_ref, o_ref):
    # q_ref: (bt, Lq, in_dim)   k_ref / v_ref: (bt, Lk, in_dim)
    # w_ref: (3, in_dim, out_dim)   b_ref: (3, 1, out_dim)
    # o_ref: (bt, Lq, out_dim)
    bt, lq, in_dim = q_ref.shape
    lk = k_ref.shape[1]
    out_dim = w_ref.shape[2]

    itemsize = jnp.dtype(q_ref.dtype).itemsize
    packing = 8 * max(1, 4 // itemsize)      # sublane packing: 8 (f32), 16 (bf16)

    def proj(x_ref, idx, l):
        w = w_ref[idx]                        # (in_dim, out_dim), static index
        b = b_ref[idx].astype(jnp.float32)    # (1, out_dim) -> broadcasts
        if l % packing == 0:
            # Layout-preserving collapse: one (bt*l, in_dim) @ (in_dim, out_dim)
            # MXU matmul over all rows of this grid step.
            x2 = x_ref[...].reshape(bt * l, in_dim)
            y = jnp.dot(x2, w, preferred_element_type=jnp.float32) + b
            return y.reshape(bt, l, out_dim)
        # Collapsing would force a relayout copy for this dtype; keep batched.
        return jnp.einsum('bld,df->blf', x_ref[...], w,
                          preferred_element_type=jnp.float32) + b

    qp = proj(q_ref, 0, lq)                   # (bt, Lq, out_dim) f32
    kp = proj(k_ref, 1, lk)                   # (bt, Lk, out_dim) f32
    vp = proj(v_ref, 2, lk)                   # (bt, Lk, out_dim) f32

    # Attention matmul operand dtype: single-pass MXU for 16-bit inputs,
    # f32 operands (multi-pass, exact) for f32 inputs.  Accumulate in f32.
    mm_dt = q_ref.dtype if itemsize < 4 else jnp.float32

    # scores[b,q,k] = sum_d qp[b,q,d] * kp[b,k,d]  (contract trailing dims --
    # feeds the MXU directly, no materialized transpose).  No 1/sqrt(d) scale,
    # matching the qlib module.
    scores = jnp.einsum('bqd,bkd->bqk', qp.astype(mm_dt), kp.astype(mm_dt),
                        preferred_element_type=jnp.float32)

    # Numerically-stable softmax over the key axis (f32 vector math).
    m = jnp.max(scores, axis=-1, keepdims=True)
    e = jnp.exp(scores - m)
    denom = jnp.sum(e, axis=-1, keepdims=True)
    probs = e * pl.reciprocal(denom, approx=True)     # EUP vrcp (free slot)

    # out[b,q,d] = sum_k probs[b,q,k] * vp[b,k,d]
    out = jnp.einsum('bqk,bkd->bqd', probs.astype(mm_dt), vp.astype(mm_dt),
                     preferred_element_type=jnp.float32)
    o_ref[...] = out.astype(o_ref.dtype)


def _vmem_capacity_bytes():
    """Per-core VMEM capacity (bytes); conservative 64 MiB fallback (v7x/TC)."""
    try:
        info = pltpu.get_tpu_info()
        for name in ("vmem_capacity_bytes", "vmem_bytes", "vmem_size_bytes"):
            v = getattr(info, name, None)
            if v:
                return int(v)
    except Exception:
        pass
    return 64 << 20


def _tile_bytes(shape, dtype):
    """VMEM bytes of one tile, accounting for lane (128) / sublane padding."""
    itemsize = jnp.dtype(dtype).itemsize
    sub = 8 * max(1, 4 // itemsize)
    dims = list(shape)
    dims[-1] = -(-dims[-1] // 128) * 128
    if len(dims) >= 2:
        dims[-2] = -(-dims[-2] // sub) * sub
    n = 1
    for d in dims:
        n *= d
    return n * itemsize


def attention_pallas(Q, K, V, wq, bq, wk, bk, wv, bv, *, batch_block=None):
    B, Lq, in_dim = Q.shape
    _, Lk, _ = K.shape
    out_dim = wq.shape[1]
    dt = Q.dtype

    # Stack the three projections so the kernel sees two small resident arrays.
    w_all = jnp.stack([wq, wk, wv], axis=0)                        # (3, in_dim, out_dim)
    b_all = jnp.stack([bq, bk, bv], axis=0).reshape(3, 1, out_dim)  # (3, 1, out_dim)

    # ---- Generation-aware VMEM budget -----------------------------------
    vmem_cap = _vmem_capacity_bytes()
    budget = min(vmem_cap // 2, 40 << 20)          # per-step working-set target
    vmem_limit = min(vmem_cap, 64 << 20)           # >= budget, <= physical on every gen

    f32 = jnp.float32
    per_b = (
        2 * (_tile_bytes((1, Lq, in_dim), dt)
             + 2 * _tile_bytes((1, Lk, in_dim), dt))        # Q,K,V blocks (double-buffered)
        + 2 * _tile_bytes((1, Lq, out_dim), dt)             # output block (double-buffered)
        + 2 * _tile_bytes((1, Lq, out_dim), f32)            # qp, out (f32)
        + 2 * _tile_bytes((1, Lk, out_dim), f32)            # kp, vp (f32)
        + 3 * _tile_bytes((1, Lq, Lk), f32)                 # scores, e, probs (f32)
    )
    if jnp.dtype(dt).itemsize < 4:
        # low-precision copies of qp/kp/vp/probs feeding the MXU
        per_b += (_tile_bytes((1, Lq, out_dim), dt)
                  + 2 * _tile_bytes((1, Lk, out_dim), dt)
                  + _tile_bytes((1, Lq, Lk), dt))
    fixed = 2 * (_tile_bytes((3, in_dim, out_dim), dt) + _tile_bytes((3, 1, out_dim), dt))
    cap = max(1, (budget - fixed) // per_b)

    # ---- Batch tile: a divisor of B (no batch padding / post-slice), with
    # >= 2 grid steps when B >= 2 so both v7x TensorCores get work. ---------
    if batch_block is not None:
        limit = max(1, min(batch_block, B))
    else:
        limit = min(cap, B)
        if B >= 2:
            limit = min(limit, max(1, B // 2))
    bt = 1
    for d in range(1, B + 1):
        if B % d == 0 and d <= limit:
            bt = d

    out = pl.pallas_call(
        _attention_kernel,
        out_shape=jax.ShapeDtypeStruct((B, Lq, out_dim), dt),
        grid_spec=pltpu.PrefetchScalarGridSpec(
            num_scalar_prefetch=0,
            grid=(B // bt,),
            in_specs=[
                pl.BlockSpec((bt, Lq, in_dim), lambda i: (i, 0, 0)),      # Q
                pl.BlockSpec((bt, Lk, in_dim), lambda i: (i, 0, 0)),      # K
                pl.BlockSpec((bt, Lk, in_dim), lambda i: (i, 0, 0)),      # V
                pl.BlockSpec((3, in_dim, out_dim), lambda i: (0, 0, 0)),  # stacked weights
                pl.BlockSpec((3, 1, out_dim), lambda i: (0, 0, 0)),       # stacked biases
            ],
            out_specs=pl.BlockSpec((bt, Lq, out_dim), lambda i: (i, 0, 0)),
        ),
        compiler_params=pltpu.CompilerParams(
            dimension_semantics=("parallel",),   # batch axis shards across TCs (v7x)
            vmem_limit_bytes=int(vmem_limit),
        ),
    )(Q, K, V, w_all, b_all)
    return out


def attention_ref(Q, K, V, wq, bq, wk, bk, wv, bv):
    q = Q @ wq + bq
    k = K @ wk + bk
    v = V @ wv + bv
    attn = jnp.einsum('ijk,ilk->ijl', q, k)
    probs = jax.nn.softmax(attn, axis=-1)
    return jnp.einsum('ijk,ikl->ijl', probs, v)


if __name__ == "__main__":
    B, Lq, Lk, in_dim, out_dim = 2, 8, 8, 32, 32

    key = jax.random.PRNGKey(0)
    k_q, k_k, k_v, k_wq, k_wk, k_wv, k_bq, k_bk, k_bv = jax.random.split(key, 9)

    Q = jax.random.normal(k_q, (B, Lq, in_dim), dtype=jnp.float32)
    K = jax.random.normal(k_k, (B, Lk, in_dim), dtype=jnp.float32)
    V = jax.random.normal(k_v, (B, Lk, in_dim), dtype=jnp.float32)

    # Deterministic parameter init (shapes match nn.Linear(in_dim, out_dim),
    # stored pre-transposed as [in_dim, out_dim]).
    scale = 1.0 / jnp.sqrt(jnp.float32(in_dim))
    wq = jax.random.uniform(k_wq, (in_dim, out_dim), jnp.float32, -scale, scale)
    wk = jax.random.uniform(k_wk, (in_dim, out_dim), jnp.float32, -scale, scale)
    wv = jax.random.uniform(k_wv, (in_dim, out_dim), jnp.float32, -scale, scale)
    bq = jax.random.uniform(k_bq, (out_dim,), jnp.float32, -scale, scale)
    bk = jax.random.uniform(k_bk, (out_dim,), jnp.float32, -scale, scale)
    bv = jax.random.uniform(k_bv, (out_dim,), jnp.float32, -scale, scale)

    out = attention_pallas(Q, K, V, wq, bq, wk, bk, wv, bv)
    out = jax.block_until_ready(out)

    ref = attention_ref(Q, K, V, wq, bq, wk, bk, wv, bv)
    assert out.shape == (B, Lq, out_dim)
    # Tolerance loosened slightly vs 1e-4 because the softmax denominator uses
    # the EUP approximate reciprocal.
    assert jnp.allclose(out, ref, atol=2e-3, rtol=2e-3), "mismatch vs reference"

    print("KERNEL_OK")
</pallas_src>

<mosaic_0001>
module attributes {stable_mosaic.version = 11 : i64} {
  func.func @_attention_kernel(%arg0: i32, %arg1: memref<1x8x32xf32, #tpu.memory_space<vmem>>, %arg2: memref<1x8x32xf32, #tpu.memory_space<vmem>>, %arg3: memref<1x8x32xf32, #tpu.memory_space<vmem>>, %arg4: memref<3x32x32xf32, #tpu.memory_space<vmem>>, %arg5: memref<3x1x32xf32, #tpu.memory_space<vmem>>, %arg6: memref<1x8x32xf32, #tpu.memory_space<vmem>>) attributes {dimension_semantics = [#tpu.dimension_semantics<parallel>], iteration_bounds = array<i64: 2>, scalar_prefetch = 0 : i64, scratch_operands = 0 : i64, tpu.core_type = #tpu.core_type<tc>, window_params = [{transform_indices = @transform_0, window_bounds = array<i64: 1, 8, 32>}, {transform_indices = @transform_1, window_bounds = array<i64: 1, 8, 32>}, {transform_indices = @transform_2, window_bounds = array<i64: 1, 8, 32>}, {pipeline_mode = #tpu.pipeline_mode<synchronous>, transform_indices = @transform_3, window_bounds = array<i64: 3, 32, 32>}, {pipeline_mode = #tpu.pipeline_mode<synchronous>, transform_indices = @transform_4, window_bounds = array<i64: 3, 1, 32>}, {transform_indices = @transform_5, window_bounds = array<i64: 1, 8, 32>}]} {
    %c0 = arith.constant 0 : index
    %c0_0 = arith.constant 0 : index
    %c0_1 = arith.constant 0 : index
    %0 = vector.load %arg4[%c0, %c0_0, %c0_1] : memref<3x32x32xf32, #tpu.memory_space<vmem>>, vector<1x32x32xf32>
    %1 = vector.shape_cast %0 : vector<1x32x32xf32> to vector<32x32xf32>
    %c0_2 = arith.constant 0 : index
    %c0_3 = arith.constant 0 : index
    %c0_4 = arith.constant 0 : index
    %2 = vector.load %arg5[%c0_2, %c0_3, %c0_4] : memref<3x1x32xf32, #tpu.memory_space<vmem>>, vector<1x1x32xf32>
    %3 = vector.shape_cast %2 : vector<1x1x32xf32> to vector<1x32xf32>
    %c0_5 = arith.constant 0 : index
    %c0_6 = arith.constant 0 : index
    %c0_7 = arith.constant 0 : index
    %4 = vector.load %arg1[%c0_5, %c0_6, %c0_7] : memref<1x8x32xf32, #tpu.memory_space<vmem>>, vector<1x8x32xf32>
    %5 = vector.shape_cast %4 : vector<1x8x32xf32> to vector<8x32xf32>
    %cst = arith.constant dense<0.000000e+00> : vector<8x32xf32>
    %6 = tpu.matmul %5, %1, %cst {dimension_numbers = #tpu.dot_dimension_numbers<[1], [0], [0], [1], [0, 0, 1, 1], [], []>} : vector<8x32xf32>, vector<32x32xf32>, vector<8x32xf32> -> vector<8x32xf32>
    %7 = vector.broadcast %3 : vector<1x32xf32> to vector<8x32xf32>
    %8 = arith.addf %6, %7 : vector<8x32xf32>
    %9 = vector.shape_cast %8 : vector<8x32xf32> to vector<1x8x32xf32>
    %c1 = arith.constant 1 : index
    %c0_8 = arith.constant 0 : index
    %c0_9 = arith.constant 0 : index
    %10 = vector.load %arg4[%c1, %c0_8, %c0_9] : memref<3x32x32xf32, #tpu.memory_space<vmem>>, vector<1x32x32xf32>
    %11 = vector.shape_cast %10 : vector<1x32x32xf32> to vector<32x32xf32>
    %c1_10 = arith.constant 1 : index
    %c0_11 = arith.constant 0 : index
    %c0_12 = arith.constant 0 : index
    %12 = vector.load %arg5[%c1_10, %c0_11, %c0_12] : memref<3x1x32xf32, #tpu.memory_space<vmem>>, vector<1x1x32xf32>
    %13 = vector.shape_cast %12 : vector<1x1x32xf32> to vector<1x32xf32>
    %c0_13 = arith.constant 0 : index
    %c0_14 = arith.constant 0 : index
    %c0_15 = arith.constant 0 : index
    %14 = vector.load %arg2[%c0_13, %c0_14, %c0_15] : memref<1x8x32xf32, #tpu.memory_space<vmem>>, vector<1x8x32xf32>
    %15 = vector.shape_cast %14 : vector<1x8x32xf32> to vector<8x32xf32>
    %cst_16 = arith.constant dense<0.000000e+00> : vector<8x32xf32>
    %16 = tpu.matmul %15, %11, %cst_16 {dimension_numbers = #tpu.dot_dimension_numbers<[1], [0], [0], [1], [0, 0, 1, 1], [], []>} : vector<8x32xf32>, vector<32x32xf32>, vector<8x32xf32> -> vector<8x32xf32>
    %17 = vector.broadcast %13 : vector<1x32xf32> to vector<8x32xf32>
    %18 = arith.addf %16, %17 : vector<8x32xf32>
    %19 = vector.shape_cast %18 : vector<8x32xf32> to vector<1x8x32xf32>
    %c2 = arith.constant 2 : index
    %c0_17 = arith.constant 0 : index
    %c0_18 = arith.constant 0 : index
    %20 = vector.load %arg4[%c2, %c0_17, %c0_18] : memref<3x32x32xf32, #tpu.memory_space<vmem>>, vector<1x32x32xf32>
    %21 = vector.shape_cast %20 : vector<1x32x32xf32> to vector<32x32xf32>
    %c2_19 = arith.constant 2 : index
    %c0_20 = arith.constant 0 : index
    %c0_21 = arith.constant 0 : index
    %22 = vector.load %arg5[%c2_19, %c0_20, %c0_21] : memref<3x1x32xf32, #tpu.memory_space<vmem>>, vector<1x1x32xf32>
    %23 = vector.shape_cast %22 : vector<1x1x32xf32> to vector<1x32xf32>
    %c0_22 = arith.constant 0 : index
    %c0_23 = arith.constant 0 : index
    %c0_24 = arith.constant 0 : index
    %24 = vector.load %arg3[%c0_22, %c0_23, %c0_24] : memref<1x8x32xf32, #tpu.memory_space<vmem>>, vector<1x8x32xf32>
    %25 = vector.shape_cast %24 : vector<1x8x32xf32> to vector<8x32xf32>
    %cst_25 = arith.constant dense<0.000000e+00> : vector<8x32xf32>
    %26 = tpu.matmul %25, %21, %cst_25 {dimension_numbers = #tpu.dot_dimension_numbers<[1], [0], [0], [1], [0, 0, 1, 1], [], []>} : vector<8x32xf32>, vector<32x32xf32>, vector<8x32xf32> -> vector<8x32xf32>
    %27 = vector.broadcast %23 : vector<1x32xf32> to vector<8x32xf32>
    %28 = arith.addf %26, %27 : vector<8x32xf32>
    %29 = vector.shape_cast %28 : vector<8x32xf32> to vector<1x8x32xf32>
    "tpu.trace_start"() <{level = 10 : i32, message = "bqd,bkd->bqk"}> : () -> ()
    %cst_26 = arith.constant dense<0.000000e+00> : vector<1x8x8xf32>
    %30 = tpu.matmul %9, %19, %cst_26 {dimension_numbers = #tpu.dot_dimension_numbers<[2], [2], [1], [1], [0, 0, 0, 1, 1, 1], [0], [0]>} : vector<1x8x32xf32>, vector<1x8x32xf32>, vector<1x8x8xf32> -> vector<1x8x8xf32>
    "tpu.trace_stop"() : () -> ()
    %cst_27 = arith.constant dense<0xFF800000> : vector<1x8xf32>
    %31 = vector.multi_reduction <maximumf>, %30, %cst_27 [2] : vector<1x8x8xf32> to vector<1x8xf32>
    %32 = vector.shape_cast %31 : vector<1x8xf32> to vector<1x8x1xf32>
    %33 = vector.broadcast %32 : vector<1x8x1xf32> to vector<1x8x8xf32>
    %34 = arith.subf %30, %33 : vector<1x8x8xf32>
    %35 = math.exp %34 : vector<1x8x8xf32>
    %cst_28 = arith.constant dense<0.000000e+00> : vector<1x8xf32>
    %36 = vector.multi_reduction <add>, %35, %cst_28 [2] : vector<1x8x8xf32> to vector<1x8xf32>
    %37 = vector.shape_cast %36 : vector<1x8xf32> to vector<1x8x1xf32>
    %38 = tpu.reciprocal %37 {approx = true} : vector<1x8x1xf32> -> vector<1x8x1xf32>
    %39 = vector.broadcast %38 : vector<1x8x1xf32> to vector<1x8x8xf32>
    %40 = arith.mulf %35, %39 : vector<1x8x8xf32>
    "tpu.trace_start"() <{level = 10 : i32, message = "bqk,bkd->bqd"}> : () -> ()
    %cst_29 = arith.constant dense<0.000000e+00> : vector<1x8x32xf32>
    %41 = tpu.matmul %40, %29, %cst_29 {dimension_numbers = #tpu.dot_dimension_numbers<[2], [1], [1], [2], [0, 0, 0, 1, 1, 2], [0], [0]>} : vector<1x8x8xf32>, vector<1x8x32xf32>, vector<1x8x32xf32> -> vector<1x8x32xf32>
    "tpu.trace_stop"() : () -> ()
    %c0_30 = arith.constant 0 : index
    %c0_31 = arith.constant 0 : index
    %c0_32 = arith.constant 0 : index
    %42 = vector.load %arg6[%c0_30, %c0_31, %c0_32] : memref<1x8x32xf32, #tpu.memory_space<vmem>>, vector<1x8x32xf32>
    tpu.vector_store %arg6[%c0_30, %c0_31, %c0_32], %41 {strides = array<i32>} : memref<1x8x32xf32, #tpu.memory_space<vmem>>, vector<1x8x32xf32>,
    return
  }
  func.func @transform_0(%arg0: i32) -> (i32, i32, i32) {
    %c0_i32 = arith.constant 0 : i32
    %c0_i32_0 = arith.constant 0 : i32
    %c0_i32_1 = arith.constant 0 : i32
    return %arg0, %c0_i32, %c0_i32_0 : i32, i32, i32
  }
  func.func @transform_1(%arg0: i32) -> (i32, i32, i32) {
    %c0_i32 = arith.constant 0 : i32
    %c0_i32_0 = arith.constant 0 : i32
    %c0_i32_1 = arith.constant 0 : i32
    return %arg0, %c0_i32, %c0_i32_0 : i32, i32, i32
  }
  func.func @transform_2(%arg0: i32) -> (i32, i32, i32) {
    %c0_i32 = arith.constant 0 : i32
    %c0_i32_0 = arith.constant 0 : i32
    %c0_i32_1 = arith.constant 0 : i32
    return %arg0, %c0_i32, %c0_i32_0 : i32, i32, i32
  }
  func.func @transform_3(%arg0: i32) -> (i32, i32, i32) {
    %c0_i32 = arith.constant 0 : i32
    %c0_i32_0 = arith.constant 0 : i32
    %c0_i32_1 = arith.constant 0 : i32
    %c0_i32_2 = arith.constant 0 : i32
    return %c0_i32, %c0_i32_0, %c0_i32_1 : i32, i32, i32
  }
  func.func @transform_4(%arg0: i32) -> (i32, i32, i32) {
    %c0_i32 = arith.constant 0 : i32
    %c0_i32_0 = arith.constant 0 : i32
    %c0_i32_1 = arith.constant 0 : i32
    %c0_i32_2 = arith.constant 0 : i32
    return %c0_i32, %c0_i32_0, %c0_i32_1 : i32, i32, i32
  }
  func.func @transform_5(%arg0: i32) -> (i32, i32, i32) {
    %c0_i32 = arith.constant 0 : i32
    %c0_i32_0 = arith.constant 0 : i32
    %c0_i32_1 = arith.constant 0 : i32
    return %arg0, %c0_i32, %c0_i32_0 : i32, i32, i32
  }
}

</mosaic_0001>

<llo_original>
// kernel: tpu_custom_call.1
$region0: #{tpu_custom_call.1}
  #allocation0 [shape = 'u32[]', space=smem, size = 0x4, offset = 0x4, fixed_abs, tag = 'smem constant byte address 0x4 - core index']
  #allocation1 [shape = 'u32[144,128]{1,0:T(1,128)}', space=vmem, size = 0x12000, scoped, tag = 'internal scratch']
  %s0 = inlined_call_operand.hbm [shape: f32[2,8,32], index: 0, kind: input, shape index: {}]
  %s1 = inlined_call_operand.hbm [shape: f32[2,8,32], index: 1, kind: input, shape index: {}]
  %s2 = inlined_call_operand.hbm [shape: f32[2,8,32], index: 2, kind: input, shape index: {}]
  %s3 = inlined_call_operand.hbm [shape: f32[3,32,32], index: 3, kind: input, shape index: {}]
  %s4 = inlined_call_operand.vmem [shape: f32[3,1,32], index: 4, kind: input, shape index: {}]
  %s5 = inlined_call_operand.hbm [shape: f32[2,8,32], index: 5, kind: output, shape index: {}]
  %s6 = sld [smem:[#allocation0]]
  $region69: #{tpu_custom_call.1} parent=0
    _
  %s8 = ssub.s32 1, %s6
  %s9 = scalar_select 0, %s8, %s6
  $region1: #{tpu_custom_call.1} parent=0
    #allocation2 [shape = 'u8[8192]{0}', space=vmem, size = 0x2000, scoped, tag = 'input window, operand 0']
    #allocation3 [shape = 's32[2]{0}', space=sflag, size = 0x8, scoped, tag = 'scoped memory for tpu_custom_call.1']
    #allocation4 [shape = 's32[2]{0}', space=sflag, size = 0x8, scoped, tag = 'scoped memory for tpu_custom_call.1']
    #allocation5 [shape = 'u8[8192]{0}', space=vmem, size = 0x2000, scoped, tag = 'input window, operand 1']
    #allocation6 [shape = 's32[2]{0}', space=sflag, size = 0x8, scoped, tag = 'scoped memory for tpu_custom_call.1']
    #allocation7 [shape = 'u8[8192]{0}', space=vmem, size = 0x2000, scoped, tag = 'input window, operand 2']
    #allocation8 [shape = 'u8[49152]{0}', space=vmem, size = 0xc000, scoped, tag = 'input window, operand 3, single buffered']
    #allocation9 [shape = 's32[1]{0}', space=sflag, size = 0x4, scoped, tag = 'scoped memory for tpu_custom_call.1']
    #allocation10 [shape = 'u8[8192]{0}', space=vmem, size = 0x2000, scoped, tag = 'output window, operand 0']
    %10 = vsyncpa [#allocation3], 0
    %s11 = scalar_lea.sflag [#allocation3], 1
    %12 = vsyncpa %s11, 0
    %13 = vsyncpa [#allocation6], 0
    %s14 = scalar_lea.sflag [#allocation6], 1
    %15 = vsyncpa %s14, 0
    %16 = vsyncpa [#allocation9], 0
    %17 = vsyncpa [#allocation4], 0
    %s18 = scalar_lea.sflag [#allocation4], 1
    %19 = vsyncpa %s18, 0
    loop: start=0, step=1, limit=4
    $region2: #{tpu_custom_call.1} parent=1 // loop_pre_header
      _
    $region3: #{tpu_custom_call.1} parent=1 // loop_header
      %s21 = sphi 0, %s25
      %p22 = scmp.ge.s32.totalorder %s21, 4
      %s31 = sphi 0, %s33
      %s34 = sphi 0, %s31
      %s35 = sphi 0, %s34
      %s51 = sphi 0, %s35
      %s57 = sphi 0, %s59
      %s60 = sphi 0, %s57
      %s61 = sphi 0, %s60
      %s77 = sphi 0, %s61
      %s83 = sphi 0, %s85
      %s86 = sphi 0, %s83
      %s87 = sphi 0, %s86
      %s103 = sphi 0, %s87
      %s107 = sphi 0, %s107
      %s109 = sphi 0, %s107
      %s110 = sphi 0, %s109
      %s124 = sphi 0, %s110
      %s128 = sphi 0, %s128
      %s130 = sphi 0, %s128
      %s131 = sphi 0, %s130
      %s145 = sphi 0, %s131
      %s151 = sphi 0, %s153
      %s154 = sphi 0, %s151
      %s155 = sphi 0, %s154
      %s171 = sphi 0, %s155
    $region4: #{tpu_custom_call.1} parent=1 // loop_header_branch
      %24 = sbr.rel (%p22) target = $region8
    $region5: #{tpu_custom_call.1} parent=1 // loop_body
      %s26 = ssub.s32 %s21, 1
      %s27 = ssub.s32 %s21, 2
      %s28 = sadd.s32 %s21, 1
      %s29 = ssub.s32 %s21, %s28
      %p30 = scmp.eq.s32.totalorder %s29, 0
      %s32 = sadd.s32 %s31, 1
      %s33 = scalar_select %p30, %s31, %s32
      %p36 = pneg %p30
      %p37 = scmp.eq.s32.totalorder %s21, 1
      %p38 = por %p36, %p37
      %p39 = scmp.ne.s32.totalorder %s31, %s34
      %p40 = scmp.eq.s32.totalorder %s21, 0
      %p41 = por %p39, %p40
      %p42 = scmp.ne.s32.totalorder %s31, %s34
      %p43 = scmp.eq.s32.totalorder %s26, 1
      %p44 = por %p42, %p43
      %p45 = scmp.ne.s32.totalorder %s34, %s35
      %p46 = scmp.eq.s32.totalorder %s26, 0
      %p47 = por %p45, %p46
      %p48 = scmp.ne.s32.totalorder %s34, %s35
      %p49 = scmp.eq.s32.totalorder %s27, 1
      %p50 = por %p48, %p49
      %p52 = scmp.ne.s32.totalorder %s35, %s51
      %p53 = scmp.eq.s32.totalorder %s27, 0
      %p54 = por %p52, %p53
      %s55 = ssub.s32 %s21, %s28
      %p56 = scmp.eq.s32.totalorder %s55, 0
      %s58 = sadd.s32 %s57, 1
      %s59 = scalar_select %p56, %s57, %s58
      %p62 = pneg %p56
      %p63 = scmp.eq.s32.totalorder %s21, 1
      %p64 = por %p62, %p63
      %p65 = scmp.ne.s32.totalorder %s57, %s60
      %p66 = scmp.eq.s32.totalorder %s21, 0
      %p67 = por %p65, %p66
      %p68 = scmp.ne.s32.totalorder %s57, %s60
      %p69 = scmp.eq.s32.totalorder %s26, 1
      %p70 = por %p68, %p69
      %p71 = scmp.ne.s32.totalorder %s60, %s61
      %p72 = scmp.eq.s32.totalorder %s26, 0
      %p73 = por %p71, %p72
      %p74 = scmp.ne.s32.totalorder %s60, %s61
      %p75 = scmp.eq.s32.totalorder %s27, 1
      %p76 = por %p74, %p75
      %p78 = scmp.ne.s32.totalorder %s61, %s77
      %p79 = scmp.eq.s32.totalorder %s27, 0
      %p80 = por %p78, %p79
      %s81 = ssub.s32 %s21, %s28
      %p82 = scmp.eq.s32.totalorder %s81, 0
      %s84 = sadd.s32 %s83, 1
      %s85 = scalar_select %p82, %s83, %s84
      %p88 = pneg %p82
      %p89 = scmp.eq.s32.totalorder %s21, 1
      %p90 = por %p88, %p89
      %p91 = scmp.ne.s32.totalorder %s83, %s86
      %p92 = scmp.eq.s32.totalorder %s21, 0
      %p93 = por %p91, %p92
      %p94 = scmp.ne.s32.totalorder %s83, %s86
      %p95 = scmp.eq.s32.totalorder %s26, 1
      %p96 = por %p94, %p95
      %p97 = scmp.ne.s32.totalorder %s86, %s87
      %p98 = scmp.eq.s32.totalorder %s26, 0
      %p99 = por %p97, %p98
      %p100 = scmp.ne.s32.totalorder %s86, %s87
      %p101 = scmp.eq.s32.totalorder %s27, 1
      %p102 = por %p100, %p101
      %p104 = scmp.ne.s32.totalorder %s87, %s103
      %p105 = scmp.eq.s32.totalorder %s27, 0
      %p106 = por %p104, %p105
      %s108 = sadd.s32 %s107, 1
      %p111 = scmp.eq.s32.totalorder %s21, 1
      %p112 = scmp.ne.s32.totalorder %s107, %s109
      %p113 = scmp.eq.s32.totalorder %s21, 0
      %p114 = por %p112, %p113
      %p115 = scmp.ne.s32.totalorder %s107, %s109
      %p116 = scmp.eq.s32.totalorder %s26, 1
      %p117 = por %p115, %p116
      %p118 = scmp.ne.s32.totalorder %s109, %s110
      %p119 = scmp.eq.s32.totalorder %s26, 0
      %p120 = por %p118, %p119
      %p121 = scmp.ne.s32.totalorder %s109, %s110
      %p122 = scmp.eq.s32.totalorder %s27, 1
      %p123 = por %p121, %p122
      %p125 = scmp.ne.s32.totalorder %s110, %s124
      %p126 = scmp.eq.s32.totalorder %s27, 0
      %p127 = por %p125, %p126
      %s129 = sadd.s32 %s128, 1
      %p132 = scmp.eq.s32.totalorder %s21, 1
      %p133 = scmp.ne.s32.totalorder %s128, %s130
      %p134 = scmp.eq.s32.totalorder %s21, 0
      %p135 = por %p133, %p134
      %p136 = scmp.ne.s32.totalorder %s128, %s130
      %p137 = scmp.eq.s32.totalorder %s26, 1
      %p138 = por %p136, %p137
      %p139 = scmp.ne.s32.totalorder %s130, %s131
      %p140 = scmp.eq.s32.totalorder %s26, 0
      %p141 = por %p139, %p140
      %p142 = scmp.ne.s32.totalorder %s130, %s131
      %p143 = scmp.eq.s32.totalorder %s27, 1
      %p144 = por %p142, %p143
      %p146 = scmp.ne.s32.totalorder %s131, %s145
      %p147 = scmp.eq.s32.totalorder %s27, 0
      %p148 = por %p146, %p147
      %s149 = ssub.s32 %s21, %s28
      %p150 = scmp.eq.s32.totalorder %s149, 0
      %s152 = sadd.s32 %s151, 1
      %s153 = scalar_select %p150, %s151, %s152
      %p156 = pneg %p150
      %p157 = scmp.eq.s32.totalorder %s21, 1
      %p158 = por %p156, %p157
      %p159 = scmp.ne.s32.totalorder %s151, %s154
      %p160 = scmp.eq.s32.totalorder %s21, 0
      %p161 = por %p159, %p160
      %p162 = scmp.ne.s32.totalorder %s151, %s154
      %p163 = scmp.eq.s32.totalorder %s26, 1
      %p164 = por %p162, %p163
      %p165 = scmp.ne.s32.totalorder %s154, %s155
      %p166 = scmp.eq.s32.totalorder %s26, 0
      %p167 = por %p165, %p166
      %p168 = scmp.ne.s32.totalorder %s154, %s155
      %p169 = scmp.eq.s32.totalorder %s27, 1
      %p170 = por %p168, %p169
      %p172 = scmp.ne.s32.totalorder %s155, %s171
      %p173 = scmp.eq.s32.totalorder %s27, 0
      %p174 = por %p172, %p173
      %p175 = scmp.le.s32.totalorder 1, %s21
      %p176 = scmp.lt.s32.totalorder %s21, 3
      %p177 = pnand %p175, %p176
      %p178 = pneg %p177
      // Predicated region
      $region9: #{tpu_custom_call.1} parent=5 // pred_check
        _
      $region10: #{tpu_custom_call.1} parent=5 // pred_check_branch
        %180 = sbr.rel (%p177) target = $region12
      $region11: #{tpu_custom_call.1} parent=5 // pred_region
        %s181 = ssub.s32 %s21, 1
        // Predicated region
        $region13: #{tpu_custom_call.1} parent=11 // pred_check
          %p182 = pneg %p120
        $region14: #{tpu_custom_call.1} parent=11 // pred_check_branch
          %184 = sbr.rel (%p182) target = $region16
        $region15: #{tpu_custom_call.1} parent=11 // pred_region
          %s186 = ssub.s32 1536, 1536
          %187 = vsyncadd [#allocation9], %s186
          %s188 = sshll.u32 [#allocation8], 4
          %s189 = int_to_ptr.vmem [resolvable:$true] %s188
          %194 = dma.hbm_to_vmem [thread:$0]  %s3, 1536, %s189, [#allocation9], 128, 128, 8
        $region16: #{tpu_custom_call.1} parent=11 // pred_fallthru
          _
        // Predicated region
        $region17: #{tpu_custom_call.1} parent=11 // pred_check
          %p195 = pneg %p141
        $region18: #{tpu_custom_call.1} parent=11 // pred_check_branch
          %197 = sbr.rel (%p195) target = $region20
        $region19: #{tpu_custom_call.1} parent=11 // pred_region
          _
        $region20: #{tpu_custom_call.1} parent=11 // pred_fallthru
          _
      $region12: #{tpu_custom_call.1} parent=5 // pred_fallthru
        _
      %p198 = scmp.lt.s32.totalorder %s21, 2
      // Predicated region
      $region21: #{tpu_custom_call.1} parent=5 // pred_check
        %p199 = pneg %p198
      $region22: #{tpu_custom_call.1} parent=5 // pred_check_branch
        %201 = sbr.rel (%p199) target = $region24
      $region23: #{tpu_custom_call.1} parent=5 // pred_region
        // Predicated region
        $region25: #{tpu_custom_call.1} parent=23 // pred_check
          %p202 = pneg %p41
        $region26: #{tpu_custom_call.1} parent=23 // pred_check_branch
          %204 = sbr.rel (%p202) target = $region28
        $region27: #{tpu_custom_call.1} parent=23 // pred_region
          %s205 = sand.u32 %s31, 1
          %s206 = scalar_lea.sflag [#allocation3], %s205
          %s207 = sand.u32 %s31, 1
          %s208 = smul.addr %s207, 8
          %s209 = scalar_lea.vmem [#allocation2], %s208
          %s211 = ssub.s32 128, 128
          %212 = vsyncadd %s206, %s211
          %s213 = smul.addr %s21, 128
          %s214 = scalar_lea.hbm %s0, %s213
          %s216 = sshll.u32 %s209, 4
          %s217 = int_to_ptr.vmem [resolvable:$true] %s216
          %219 = dma.hbm_to_vmem [thread:$0]  %s214, 128, %s217, %s206
        $region28: #{tpu_custom_call.1} parent=23 // pred_fallthru
          _
        // Predicated region
        $region29: #{tpu_custom_call.1} parent=23 // pred_check
          %p220 = pneg %p67
        $region30: #{tpu_custom_call.1} parent=23 // pred_check_branch
          %222 = sbr.rel (%p220) target = $region32
        $region31: #{tpu_custom_call.1} parent=23 // pred_region
          %s223 = sand.u32 %s21, 1
          %s224 = scalar_lea.sflag [#allocation6], %s223
          %s225 = sand.u32 %s57, 1
          %s226 = smul.addr %s225, 8
          %s227 = scalar_lea.vmem [#allocation5], %s226
          %s229 = ssub.s32 128, 128
          %230 = vsyncadd %s224, %s229
          %s231 = smul.addr %s21, 128
          %s232 = scalar_lea.hbm %s1, %s231
          %s234 = sshll.u32 %s227, 4
          %s235 = int_to_ptr.vmem [resolvable:$true] %s234
          %237 = dma.hbm_to_vmem [thread:$0]  %s232, 128, %s235, %s224
        $region32: #{tpu_custom_call.1} parent=23 // pred_fallthru
          _
        // Predicated region
        $region33: #{tpu_custom_call.1} parent=23 // pred_check
          %p238 = pneg %p93
        $region34: #{tpu_custom_call.1} parent=23 // pred_check_branch
          %240 = sbr.rel (%p238) target = $region36
        $region35: #{tpu_custom_call.1} parent=23 // pred_region
          %s241 = sand.u32 %s21, 1
          %s242 = scalar_lea.sflag [#allocation6], %s241
          %s243 = sand.u32 %s83, 1
          %s244 = smul.addr %s243, 8
          %s245 = scalar_lea.vmem [#allocation7], %s244
          %s247 = ssub.s32 128, 128
          %248 = vsyncadd %s242, %s247
          %s249 = smul.addr %s21, 128
          %s250 = scalar_lea.hbm %s2, %s249
          %s252 = sshll.u32 %s245, 4
          %s253 = int_to_ptr.vmem [resolvable:$true] %s252
          %255 = dma.hbm_to_vmem [thread:$0]  %s250, 128, %s253, %s242
        $region36: #{tpu_custom_call.1} parent=23 // pred_fallthru
          _
      $region24: #{tpu_custom_call.1} parent=5 // pred_fallthru
        _
      %p256 = scmp.le.s32.totalorder 1, %s21
      %p257 = scmp.lt.s32.totalorder %s21, 3
      %p258 = pnand %p256, %p257
      %p259 = pneg %p258
      // Predicated region
      $region37: #{tpu_custom_call.1} parent=5 // pred_check
        _
      $region38: #{tpu_custom_call.1} parent=5 // pred_check_branch
        %261 = sbr.rel (%p258) target = $region40
      $region39: #{tpu_custom_call.1} parent=5 // pred_region
        %s262 = ssub.s32 %s21, 1
        %s263 = sand.u32 %s34, 1
        %s264 = scalar_lea.sflag [#allocation3], %s263
        %s265 = sand.u32 %s34, 1
        %s266 = smul.addr %s265, 8
        %s267 = scalar_lea.vmem [#allocation2], %s266
        // Predicated region
        $region41: #{tpu_custom_call.1} parent=39 // pred_check
          %p268 = pneg %p47
        $region42: #{tpu_custom_call.1} parent=39 // pred_check_branch
          %270 = sbr.rel (%p268) target = $region44
        $region43: #{tpu_custom_call.1} parent=39 // pred_region
          %271 = dma.done %s264, 128
        $region44: #{tpu_custom_call.1} parent=39 // pred_fallthru
          _
        %s272 = sand.u32 %s26, 1
        %s273 = scalar_lea.sflag [#allocation6], %s272
        %s274 = sand.u32 %s60, 1
        %s275 = smul.addr %s274, 8
        %s276 = scalar_lea.vmem [#allocation5], %s275
        // Predicated region
        $region45: #{tpu_custom_call.1} parent=39 // pred_check
          %p277 = pneg %p73
        $region46: #{tpu_custom_call.1} parent=39 // pred_check_branch
          %279 = sbr.rel (%p277) target = $region48
        $region47: #{tpu_custom_call.1} parent=39 // pred_region
          %280 = dma.done %s273, 128
        $region48: #{tpu_custom_call.1} parent=39 // pred_fallthru
          _
        %s281 = sand.u32 %s26, 1
        %s282 = scalar_lea.sflag [#allocation6], %s281
        %s283 = sand.u32 %s86, 1
        %s284 = smul.addr %s283, 8
        %s285 = scalar_lea.vmem [#allocation7], %s284
        // Predicated region
        $region49: #{tpu_custom_call.1} parent=39 // pred_check
          %p286 = pneg %p99
        $region50: #{tpu_custom_call.1} parent=39 // pred_check_branch
          %288 = sbr.rel (%p286) target = $region52
        $region51: #{tpu_custom_call.1} parent=39 // pred_region
          %289 = dma.done %s282, 128
        $region52: #{tpu_custom_call.1} parent=39 // pred_fallthru
          _
        // Predicated region
        $region53: #{tpu_custom_call.1} parent=39 // pred_check
          %p290 = pneg %p120
        $region54: #{tpu_custom_call.1} parent=39 // pred_check_branch
          %292 = sbr.rel (%p290) target = $region56
        $region55: #{tpu_custom_call.1} parent=39 // pred_region
          %293 = dma.done [#allocation9], 1536
        $region56: #{tpu_custom_call.1} parent=39 // pred_fallthru
          _
        %s294 = sand.u32 %s34, 1
        %s295 = scalar_lea.sflag [#allocation3], %s294
        %s296 = sand.u32 %s34, 1
        %s297 = smul.addr %s296, 8
        %s298 = scalar_lea.vmem [#allocation2], %s297
        %p299 = pneg %p47
        %p300 = pneg %p44
        %s301 = sand.u32 %s26, 1
        %s302 = scalar_lea.sflag [#allocation6], %s301
        %s303 = sand.u32 %s60, 1
        %s304 = smul.addr %s303, 8
        %s305 = scalar_lea.vmem [#allocation5], %s304
        %p306 = pneg %p73
        %p307 = pneg %p70
        %s308 = sand.u32 %s26, 1
        %s309 = scalar_lea.sflag [#allocation6], %s308
        %s310 = sand.u32 %s86, 1
        %s311 = smul.addr %s310, 8
        %s312 = scalar_lea.vmem [#allocation7], %s311
        %p313 = pneg %p99
        %p314 = pneg %p96
        %p315 = pneg %p120
        %p316 = pneg %p117
        %p317 = pneg %p141
        %p318 = pneg %p138
        %p319 = pneg %p167
        %p320 = pneg %p164
        %s321 = sand.u32 %s154, 1
        %s322 = scalar_lea.sflag [#allocation4], %s321
        %s323 = sand.u32 %s154, 1
        %s324 = smul.addr %s323, 8
        %s325 = scalar_lea.vmem [#allocation10], %s324
        %v326 = vld [vmem:[#allocation8] sm:$0xff]
        %v327 = vld [vmem:[#allocation8 + $0x8] sm:$0xff]
        %v328 = vld [vmem:[#allocation8 + $0x10] sm:$0xff]
        %v329 = vld [vmem:[#allocation8 + $0x18] sm:$0xff]
        %v330 = vld [vmem:[%s4] sm:$0x1]
        %v331 = vld [vmem:[%s267] sm:$0xff]
        %v333 = vlaneseq
        %v334 = vshrl.u32 %v333, 7
        %v335 = vsub.s32 0, %v334
        %v336 = vrot.slane %v330, %v335
        %vm338 = vcmask 261120
        %v340 = vsel %vm338, %v331, 0
        %342 = vmatprep.subr.mxu0 0.0
        %343 = vmatpush1.msra.mxu0 0.0
        %344 = vmatprep.subr.mxu0 0.0
        %345 = vmatpush1.msra.mxu0 0.0
        %346 = vmatprep.subr.mxu0 0.0
        %347 = vmatpush1.msra.mxu0 0.0
        %348 = vmatprep.subr.mxu0 0.0
        %349 = vmatpush1.msra.mxu0 0.0
        %350 = vmatprep.subr.mxu0 0.0
        %351 = vmatpush1.msra.mxu0 0.0
        %352 = vmatprep.subr.mxu0 0.0
        %353 = vmatpush1.msra.mxu0 0.0
        %354 = vmatprep.subr.mxu0 0.0
        %355 = vmatpush1.msra.mxu0 0.0
        %356 = vmatprep.subr.mxu0 0.0
        %357 = vmatpush1.msra.mxu0 0.0
        %358 = vmatprep.subr.mxu0 0.0
        %359 = vmatpush1.msra.mxu0 0.0
        %360 = vmatprep.subr.mxu0 0.0
        %361 = vmatpush1.msra.mxu0 0.0
        %362 = vmatprep.subr.mxu0 0.0
        %363 = vmatpush1.msra.mxu0 0.0
        %364 = vmatprep.subr.mxu0 0.0
        %365 = vmatpush1.msra.mxu0 0.0
        %366 = vmatprep.subr.mxu0 0.0
        %367 = vmatpush1.msra.mxu0 %v329
        %368 = vmatprep.subr.mxu0 0.0
        %369 = vmatpush1.msra.mxu0 %v328
        %370 = vmatprep.subr.mxu0 0.0
        %371 = vmatpush1.msra.mxu0 %v327
        %372 = vmatprep.subr.mxu0 0.0
        %373 = vmatpush1.msra.mxu0 %v326
        %374 = vmatprep.subr.mxu0 0.0
        %375 = vmatpush2.msra.mxu0 0.0
        %376 = vmatprep.subr.mxu0 0.0
        %377 = vmatpush2.msra.mxu0 0.0
        %378 = vmatprep.subr.mxu0 0.0
        %379 = vmatpush2.msra.mxu0 0.0
        %380 = vmatprep.subr.mxu0 0.0
        %381 = vmatpush2.msra.mxu0 0.0
        %382 = vmatprep.subr.mxu0 0.0
        %383 = vmatpush2.msra.mxu0 0.0
        %384 = vmatprep.subr.mxu0 0.0
        %385 = vmatpush2.msra.mxu0 0.0
        %386 = vmatprep.subr.mxu0 0.0
        %387 = vmatpush2.msra.mxu0 0.0
        %388 = vmatprep.subr.mxu0 0.0
        %389 = vmatpush2.msra.mxu0 0.0
        %390 = vmatprep.subr.mxu0 0.0
        %391 = vmatpush2.msra.mxu0 0.0
        %392 = vmatprep.subr.mxu0 0.0
        %393 = vmatpush2.msra.mxu0 0.0
        %394 = vmatprep.subr.mxu0 0.0
        %395 = vmatpush2.msra.mxu0 0.0
        %396 = vmatprep.subr.mxu0 0.0
        %397 = vmatpush2.msra.mxu0 0.0
        %398 = vmatprep.subr.mxu0 0.0
        %399 = vmatpush2.msra.mxu0 0.0
        %400 = vmatprep.subr.mxu0 0.0
        %401 = vmatpush2.msra.mxu0 0.0
        %402 = vmatprep.subr.mxu0 0.0
        %403 = vmatpush2.msra.mxu0 0.0
        %404 = vmatprep.subr.mxu0 0.0
        %405 = vmatpush2.msra.mxu0 0.0
        %406 = vmatprep.mubr.f32.mxu0 0.0
        %407 = vmatmul.mubr.f32.gmra.mxu0 %v340
        %v408 = vpop.f32.mrf.mxu0
        %v409 = vadd.f32 %v336, %v408
        %v410 = vpop.f32.mrf.mxu0
        %411 = vdwg.mxu0
        %s412 = scalar_lea.vmem [#allocation8], 32
        %v413 = vld [vmem:[%s412] sm:$0xff]
        %v414 = vld [vmem:[%s412 + $0x8] sm:$0xff]
        %v415 = vld [vmem:[%s412 + $0x10] sm:$0xff]
        %v416 = vld [vmem:[%s412 + $0x18] sm:$0xff]
        %s417 = scalar_lea.vmem %s4, 1
        %v418 = vld [vmem:[%s417] sm:$0x1]
        %v419 = vld [vmem:[%s276] sm:$0xff]
        %v421 = vlaneseq
        %v422 = vshrl.u32 %v421, 7
        %v423 = vsub.s32 0, %v422
        %v424 = vrot.slane %v418, %v423
        %v427 = vsel %vm338, %v419, 0
        %429 = vmatprep.subr.mxu0 0.0
        %430 = vmatpush1.msra.mxu0 0.0
        %431 = vmatprep.subr.mxu0 0.0
        %432 = vmatpush1.msra.mxu0 0.0
        %433 = vmatprep.subr.mxu0 0.0
        %434 = vmatpush1.msra.mxu0 0.0
        %435 = vmatprep.subr.mxu0 0.0
        %436 = vmatpush1.msra.mxu0 0.0
        %437 = vmatprep.subr.mxu0 0.0
        %438 = vmatpush1.msra.mxu0 0.0
        %439 = vmatprep.subr.mxu0 0.0
        %440 = vmatpush1.msra.mxu0 0.0
        %441 = vmatprep.subr.mxu0 0.0
        %442 = vmatpush1.msra.mxu0 0.0
        %443 = vmatprep.subr.mxu0 0.0
        %444 = vmatpush1.msra.mxu0 0.0
        %445 = vmatprep.subr.mxu0 0.0
        %446 = vmatpush1.msra.mxu0 0.0
        %447 = vmatprep.subr.mxu0 0.0
        %448 = vmatpush1.msra.mxu0 0.0
        %449 = vmatprep.subr.mxu0 0.0
        %450 = vmatpush1.msra.mxu0 0.0
        %451 = vmatprep.subr.mxu0 0.0
        %452 = vmatpush1.msra.mxu0 0.0
        %453 = vmatprep.subr.mxu0 0.0
        %454 = vmatpush1.msra.mxu0 %v416
        %455 = vmatprep.subr.mxu0 0.0
        %456 = vmatpush1.msra.mxu0 %v415
        %457 = vmatprep.subr.mxu0 0.0
        %458 = vmatpush1.msra.mxu0 %v414
        %459 = vmatprep.subr.mxu0 0.0
        %460 = vmatpush1.msra.mxu0 %v413
        %461 = vmatprep.subr.mxu0 0.0
        %462 = vmatpush2.msra.mxu0 0.0
        %463 = vmatprep.subr.mxu0 0.0
        %464 = vmatpush2.msra.mxu0 0.0
        %465 = vmatprep.subr.mxu0 0.0
        %466 = vmatpush2.msra.mxu0 0.0
        %467 = vmatprep.subr.mxu0 0.0
        %468 = vmatpush2.msra.mxu0 0.0
        %469 = vmatprep.subr.mxu0 0.0
        %470 = vmatpush2.msra.mxu0 0.0
        %471 = vmatprep.subr.mxu0 0.0
        %472 = vmatpush2.msra.mxu0 0.0
        %473 = vmatprep.subr.mxu0 0.0
        %474 = vmatpush2.msra.mxu0 0.0
        %475 = vmatprep.subr.mxu0 0.0
        %476 = vmatpush2.msra.mxu0 0.0
        %477 = vmatprep.subr.mxu0 0.0
        %478 = vmatpush2.msra.mxu0 0.0
        %479 = vmatprep.subr.mxu0 0.0
        %480 = vmatpush2.msra.mxu0 0.0
        %481 = vmatprep.subr.mxu0 0.0
        %482 = vmatpush2.msra.mxu0 0.0
        %483 = vmatprep.subr.mxu0 0.0
        %484 = vmatpush2.msra.mxu0 0.0
        %485 = vmatprep.subr.mxu0 0.0
        %486 = vmatpush2.msra.mxu0 0.0
        %487 = vmatprep.subr.mxu0 0.0
        %488 = vmatpush2.msra.mxu0 0.0
        %489 = vmatprep.subr.mxu0 0.0
        %490 = vmatpush2.msra.mxu0 0.0
        %491 = vmatprep.subr.mxu0 0.0
        %492 = vmatpush2.msra.mxu0 0.0
        %493 = vmatprep.mubr.f32.mxu0 0.0
        %494 = vmatmul.mubr.f32.gmra.mxu0 %v427
        %v495 = vpop.f32.mrf.mxu0
        %v496 = vadd.f32 %v424, %v495
        %v497 = vpop.f32.mrf.mxu0
        %498 = vdwg.mxu0
        %s499 = scalar_lea.vmem [#allocation8], 64
        %v500 = vld [vmem:[%s499] sm:$0xff]
        %v501 = vld [vmem:[%s499 + $0x8] sm:$0xff]
        %v502 = vld [vmem:[%s499 + $0x10] sm:$0xff]
        %v503 = vld [vmem:[%s499 + $0x18] sm:$0xff]
        %s504 = scalar_lea.vmem %s4, 2
        %v505 = vld [vmem:[%s504] sm:$0x1]
        %v506 = vld [vmem:[%s285] sm:$0xff]
        %v508 = vlaneseq
        %v509 = vshrl.u32 %v508, 7
        %v510 = vsub.s32 0, %v509
        %v511 = vrot.slane %v505, %v510
        %v514 = vsel %vm338, %v506, 0
        %516 = vmatprep.subr.mxu0 0.0
        %517 = vmatpush1.msra.mxu0 0.0
        %518 = vmatprep.subr.mxu0 0.0
        %519 = vmatpush1.msra.mxu0 0.0
        %520 = vmatprep.subr.mxu0 0.0
        %521 = vmatpush1.msra.mxu0 0.0
        %522 = vmatprep.subr.mxu0 0.0
        %523 = vmatpush1.msra.mxu0 0.0
        %524 = vmatprep.subr.mxu0 0.0
        %525 = vmatpush1.msra.mxu0 0.0
        %526 = vmatprep.subr.mxu0 0.0
        %527 = vmatpush1.msra.mxu0 0.0
        %528 = vmatprep.subr.mxu0 0.0
        %529 = vmatpush1.msra.mxu0 0.0
        %530 = vmatprep.subr.mxu0 0.0
        %531 = vmatpush1.msra.mxu0 0.0
        %532 = vmatprep.subr.mxu0 0.0
        %533 = vmatpush1.msra.mxu0 0.0
        %534 = vmatprep.subr.mxu0 0.0
        %535 = vmatpush1.msra.mxu0 0.0
        %536 = vmatprep.subr.mxu0 0.0
        %537 = vmatpush1.msra.mxu0 0.0
        %538 = vmatprep.subr.mxu0 0.0
        %539 = vmatpush1.msra.mxu0 0.0
        %540 = vmatprep.subr.mxu0 0.0
        %541 = vmatpush1.msra.mxu0 %v503
        %542 = vmatprep.subr.mxu0 0.0
        %543 = vmatpush1.msra.mxu0 %v502
        %544 = vmatprep.subr.mxu0 0.0
        %545 = vmatpush1.msra.mxu0 %v501
        %546 = vmatprep.subr.mxu0 0.0
        %547 = vmatpush1.msra.mxu0 %v500
        %548 = vmatprep.subr.mxu0 0.0
        %549 = vmatpush2.msra.mxu0 0.0
        %550 = vmatprep.subr.mxu0 0.0
        %551 = vmatpush2.msra.mxu0 0.0
        %552 = vmatprep.subr.mxu0 0.0
        %553 = vmatpush2.msra.mxu0 0.0
        %554 = vmatprep.subr.mxu0 0.0
        %555 = vmatpush2.msra.mxu0 0.0
        %556 = vmatprep.subr.mxu0 0.0
        %557 = vmatpush2.msra.mxu0 0.0
        %558 = vmatprep.subr.mxu0 0.0
        %559 = vmatpush2.msra.mxu0 0.0
        %560 = vmatprep.subr.mxu0 0.0
        %561 = vmatpush2.msra.mxu0 0.0
        %562 = vmatprep.subr.mxu0 0.0
        %563 = vmatpush2.msra.mxu0 0.0
        %564 = vmatprep.subr.mxu0 0.0
        %565 = vmatpush2.msra.mxu0 0.0
        %566 = vmatprep.subr.mxu0 0.0
        %567 = vmatpush2.msra.mxu0 0.0
        %568 = vmatprep.subr.mxu0 0.0
        %569 = vmatpush2.msra.mxu0 0.0
        %570 = vmatprep.subr.mxu0 0.0
        %571 = vmatpush2.msra.mxu0 0.0
        %572 = vmatprep.subr.mxu0 0.0
        %573 = vmatpush2.msra.mxu0 0.0
        %574 = vmatprep.subr.mxu0 0.0
        %575 = vmatpush2.msra.mxu0 0.0
        %576 = vmatprep.subr.mxu0 0.0
        %577 = vmatpush2.msra.mxu0 0.0
        %578 = vmatprep.subr.mxu0 0.0
        %579 = vmatpush2.msra.mxu0 0.0
        %580 = vmatprep.mubr.f32.mxu0 0.0
        %581 = vmatmul.mubr.f32.gmra.mxu0 %v514
        %v582 = vpop.f32.mrf.mxu0
        %v583 = vadd.f32 %v511, %v582
        %v584 = vpop.f32.mrf.mxu0
        %585 = vdwg.mxu0
        %v587 = vsel %vm338, %v409, 0
        %v590 = vsel %vm338, %v496, 0
        %592 = vmatprep.subr.mxu0 0.0
        %593 = vmatpush1.xpose.msra.mxu0 0.0
        %594 = vmatprep.subr.mxu0 0.0
        %595 = vmatpush1.xpose.msra.mxu0 0.0
        %596 = vmatprep.subr.mxu0 0.0
        %597 = vmatpush1.xpose.msra.mxu0 0.0
        %598 = vmatprep.subr.mxu0 0.0
        %599 = vmatpush1.xpose.msra.mxu0 0.0
        %600 = vmatprep.subr.mxu0 0.0
        %601 = vmatpush1.xpose.msra.mxu0 0.0
        %602 = vmatprep.subr.mxu0 0.0
        %603 = vmatpush1.xpose.msra.mxu0 0.0
        %604 = vmatprep.subr.mxu0 0.0
        %605 = vmatpush1.xpose.msra.mxu0 0.0
        %606 = vmatprep.subr.mxu0 0.0
        %607 = vmatpush1.xpose.msra.mxu0 0.0
        %608 = vmatprep.subr.mxu0 0.0
        %609 = vmatpush1.xpose.msra.mxu0 0.0
        %610 = vmatprep.subr.mxu0 0.0
        %611 = vmatpush1.xpose.msra.mxu0 0.0
        %612 = vmatprep.subr.mxu0 0.0
        %613 = vmatpush1.xpose.msra.mxu0 0.0
        %614 = vmatprep.subr.mxu0 0.0
        %615 = vmatpush1.xpose.msra.mxu0 0.0
        %616 = vmatprep.subr.mxu0 0.0
        %617 = vmatpush1.xpose.msra.mxu0 0.0
        %618 = vmatprep.subr.mxu0 0.0
        %619 = vmatpush1.xpose.msra.mxu0 0.0
        %620 = vmatprep.subr.mxu0 0.0
        %621 = vmatpush1.xpose.msra.mxu0 0.0
        %622 = vmatprep.subr.mxu0 0.0
        %623 = vmatpush1.xpose.msra.mxu0 %v590
        %624 = vmatprep.subr.mxu0 0.0
        %625 = vmatpush2.xpose.msra.mxu0 0.0
        %626 = vmatprep.subr.mxu0 0.0
        %627 = vmatpush2.xpose.msra.mxu0 0.0
        %628 = vmatprep.subr.mxu0 0.0
        %629 = vmatpush2.xpose.msra.mxu0 0.0
        %630 = vmatprep.subr.mxu0 0.0
        %631 = vmatpush2.xpose.msra.mxu0 0.0
        %632 = vmatprep.subr.mxu0 0.0
        %633 = vmatpush2.xpose.msra.mxu0 0.0
        %634 = vmatprep.subr.mxu0 0.0
        %635 = vmatpush2.xpose.msra.mxu0 0.0
        %636 = vmatprep.subr.mxu0 0.0
        %637 = vmatpush2.xpose.msra.mxu0 0.0
        %638 = vmatprep.subr.mxu0 0.0
        %639 = vmatpush2.xpose.msra.mxu0 0.0
        %640 = vmatprep.subr.mxu0 0.0
        %641 = vmatpush2.xpose.msra.mxu0 0.0
        %642 = vmatprep.subr.mxu0 0.0
        %643 = vmatpush2.xpose.msra.mxu0 0.0
        %644 = vmatprep.subr.mxu0 0.0
        %645 = vmatpush2.xpose.msra.mxu0 0.0
        %646 = vmatprep.subr.mxu0 0.0
        %647 = vmatpush2.xpose.msra.mxu0 0.0
        %648 = vmatprep.subr.mxu0 0.0
        %649 = vmatpush2.xpose.msra.mxu0 0.0
        %650 = vmatprep.subr.mxu0 0.0
        %651 = vmatpush2.xpose.msra.mxu0 0.0
        %652 = vmatprep.subr.mxu0 0.0
        %653 = vmatpush2.xpose.msra.mxu0 0.0
        %654 = vmatprep.subr.mxu0 0.0
        %655 = vmatpush2.xpose.msra.mxu0 0.0
        %656 = vmatprep.mubr.f32.mxu0 0.0
        %657 = vmatmul.mubr.f32.gmra.mxu0 %v587
        %v658 = vpop.f32.mrf.mxu0
        %v659 = vadd.f32 0.0, %v658
        %v660 = vpop.f32.mrf.mxu0
        %661 = vdwg.mxu0
        %vm662 = vcmask 64512
        %v663 = vsel %vm662, %v659, -inf
        %664 = vmax.xlane.f32.xlu0 %v663
        %v665 = vpop.xlane.xlu0 %664
        %v666 = vsub.f32 %v659, %v665
        %v667 = vmul.f32 %v666, 1.442695
        %v668 = vpow.pop %v667
        %v669 = vsel %vm662, %v668, 0.0
        %670 = vadd.xlane.f32.xlu0 %v669
        %v671 = vpop.xlane.xlu0 %670
        %v672 = vrcp.pop %v671
        %v673 = vmul.f32 %v668, %v672
        %v675 = vsel %vm662, %v673, 0
        %677 = vmatprep.subr.mxu0 0.0
        %678 = vmatpush1.msra.mxu0 0.0
        %679 = vmatprep.subr.mxu0 0.0
        %680 = vmatpush1.msra.mxu0 0.0
        %681 = vmatprep.subr.mxu0 0.0
        %682 = vmatpush1.msra.mxu0 0.0
        %683 = vmatprep.subr.mxu0 0.0
        %684 = vmatpush1.msra.mxu0 0.0
        %685 = vmatprep.subr.mxu0 0.0
        %686 = vmatpush1.msra.mxu0 0.0
        %687 = vmatprep.subr.mxu0 0.0
        %688 = vmatpush1.msra.mxu0 0.0
        %689 = vmatprep.subr.mxu0 0.0
        %690 = vmatpush1.msra.mxu0 0.0
        %691 = vmatprep.subr.mxu0 0.0
        %692 = vmatpush1.msra.mxu0 0.0
        %693 = vmatprep.subr.mxu0 0.0
        %694 = vmatpush1.msra.mxu0 0.0
        %695 = vmatprep.subr.mxu0 0.0
        %696 = vmatpush1.msra.mxu0 0.0
        %697 = vmatprep.subr.mxu0 0.0
        %698 = vmatpush1.msra.mxu0 0.0
        %699 = vmatprep.subr.mxu0 0.0
        %700 = vmatpush1.msra.mxu0 0.0
        %701 = vmatprep.subr.mxu0 0.0
        %702 = vmatpush1.msra.mxu0 0.0
        %703 = vmatprep.subr.mxu0 0.0
        %704 = vmatpush1.msra.mxu0 0.0
        %705 = vmatprep.subr.mxu0 0.0
        %706 = vmatpush1.msra.mxu0 0.0
        %707 = vmatprep.subr.mxu0 0.0
        %708 = vmatpush1.msra.mxu0 %v583
        %709 = vmatprep.subr.mxu0 0.0
        %710 = vmatpush2.msra.mxu0 0.0
        %711 = vmatprep.subr.mxu0 0.0
        %712 = vmatpush2.msra.mxu0 0.0
        %713 = vmatprep.subr.mxu0 0.0
        %714 = vmatpush2.msra.mxu0 0.0
        %715 = vmatprep.subr.mxu0 0.0
        %716 = vmatpush2.msra.mxu0 0.0
        %717 = vmatprep.subr.mxu0 0.0
        %718 = vmatpush2.msra.mxu0 0.0
        %719 = vmatprep.subr.mxu0 0.0
        %720 = vmatpush2.msra.mxu0 0.0
        %721 = vmatprep.subr.mxu0 0.0
        %722 = vmatpush2.msra.mxu0 0.0
        %723 = vmatprep.subr.mxu0 0.0
        %724 = vmatpush2.msra.mxu0 0.0
        %725 = vmatprep.subr.mxu0 0.0
        %726 = vmatpush2.msra.mxu0 0.0
        %727 = vmatprep.subr.mxu0 0.0
        %728 = vmatpush2.msra.mxu0 0.0
        %729 = vmatprep.subr.mxu0 0.0
        %730 = vmatpush2.msra.mxu0 0.0
        %731 = vmatprep.subr.mxu0 0.0
        %732 = vmatpush2.msra.mxu0 0.0
        %733 = vmatprep.subr.mxu0 0.0
        %734 = vmatpush2.msra.mxu0 0.0
        %735 = vmatprep.subr.mxu0 0.0
        %736 = vmatpush2.msra.mxu0 0.0
        %737 = vmatprep.subr.mxu0 0.0
        %738 = vmatpush2.msra.mxu0 0.0
        %739 = vmatprep.subr.mxu0 0.0
        %740 = vmatpush2.msra.mxu0 0.0
        %741 = vmatprep.mubr.f32.mxu0 0.0
        %742 = vmatmul.mubr.f32.gmra.mxu0 %v675
        %v743 = vpop.f32.mrf.mxu0
        %v744 = vadd.f32 0.0, %v743
        %v745 = vpop.f32.mrf.mxu0
        %746 = vdwg.mxu0
        %747 = vst.msk [vmem:[%s325] sm:$0xff] %vm338, %v744
        %s748 = sand.u32 %s154, 1
        %s749 = scalar_lea.sflag [#allocation4], %s748
        %s750 = sand.u32 %s154, 1
        %s751 = smul.addr %s750, 8
        %s752 = scalar_lea.vmem [#allocation10], %s751
        // Predicated region
        $region57: #{tpu_custom_call.1} parent=39 // pred_check
          %p753 = pneg %p164
        $region58: #{tpu_custom_call.1} parent=39 // pred_check_branch
          %755 = sbr.rel (%p753) target = $region60
        $region59: #{tpu_custom_call.1} parent=39 // pred_region
          %s757 = ssub.s32 128, 128
          %758 = vsyncadd %s749, %s757
          %s759 = smul.addr %s26, 128
          %s760 = scalar_lea.hbm %s5, %s759
          %s762 = sshll.u32 %s752, 4
          %s763 = int_to_ptr.vmem [resolvable:$true] %s762
          %765 = dma.vmem_to_hbm [thread:$0]  %s763, 128, %s760, %s749
        $region60: #{tpu_custom_call.1} parent=39 // pred_fallthru
          _
      $region40: #{tpu_custom_call.1} parent=5 // pred_fallthru
        _
      %p766 = scmp.le.s32.totalorder 2, %s21
      // Predicated region
      $region61: #{tpu_custom_call.1} parent=5 // pred_check
        %p767 = pneg %p766
      $region62: #{tpu_custom_call.1} parent=5 // pred_check_branch
        %769 = sbr.rel (%p767) target = $region64
      $region63: #{tpu_custom_call.1} parent=5 // pred_region
        %s770 = ssub.s32 %s21, 2
        // Predicated region
        $region65: #{tpu_custom_call.1} parent=63 // pred_check
          %p771 = pneg %p170
        $region66: #{tpu_custom_call.1} parent=63 // pred_check_branch
          %773 = sbr.rel (%p771) target = $region68
        $region67: #{tpu_custom_call.1} parent=63 // pred_region
          %s774 = sand.u32 %s155, 1
          %s775 = scalar_lea.sflag [#allocation4], %s774
          %s776 = sand.u32 %s155, 1
          %s777 = smul.addr %s776, 8
          %s778 = scalar_lea.vmem [#allocation10], %s777
          %779 = dma.done %s775, 128
        $region68: #{tpu_custom_call.1} parent=63 // pred_fallthru
          _
      $region64: #{tpu_custom_call.1} parent=5 // pred_fallthru
        _
    $region6: #{tpu_custom_call.1} parent=1 // loop_footer
      %s25 = sadd.s32 1, %s21
    $region7: #{tpu_custom_call.1} parent=1 // loop_footer_branch
      %20 = sbr.rel target = $region3
    $region8: #{tpu_custom_call.1} parent=1 // loop_exit
      _
    %780 = vsyncpa [#allocation3], 1
    %s781 = scalar_lea.sflag [#allocation3], 1
    %782 = vsyncpa %s781, 1
    %783 = vsyncpa [#allocation6], 1
    %s784 = scalar_lea.sflag [#allocation6], 1
    %785 = vsyncpa %s784, 1
    %786 = vsyncpa [#allocation9], 1
    %787 = vsyncpa [#allocation4], 1
    %s788 = scalar_lea.sflag [#allocation4], 1
    %789 = vsyncpa %s788, 1

</llo_original>
